<compile_context>
chip_gen: v6e
topology: v6e:2x2x1
jax: 0.10.0
libtpu: 0.0.40
codegen_flags: <defaults>
</compile_context>

<pallas_src>
import functools

import jax
import jax.numpy as jnp
from jax.experimental import pallas as pl
from jax.experimental.pallas import tpu as pltpu

T = 0.01        # temperature from LogitNormLoss(t=0.01)
EPS = 1e-07
NUM_CORES = 2   # parallel grid split; v7x has 2 TCs/chip, harmless on v5e/v6e


def _logitnorm_loss_kernel(n_valid_ref, x_ref, tgt_ref, out_ref, acc_ref, *,
                           tile_n, tiles_per_core, t, eps):
    p = pl.program_id(0)   # core (parallel axis)
    i = pl.program_id(1)   # tile within this core (arbitrary; carries the acc)

    @pl.when(i == 0)
    def _():
        acc_ref[...] = jnp.zeros_like(acc_ref)

    x = x_ref[...].astype(jnp.float32)     # cast in-kernel, hidden under the DMA
    tgt = tgt_ref[...]                     # (tile_n, 1) int32

    # logits = x / (||x||_2 + eps) / t, fused into one EUP rsqrt + one multiply
    # (eps^2 inside the rsqrt only guards the all-zero row; |delta| << 1e-5).
    sq = jnp.sum(x * x, axis=-1, keepdims=True)                # (tile_n, 1)
    inv = jax.lax.rsqrt(sq + eps * eps) * (1.0 / t)            # (tile_n, 1)
    logits = x * inv                                           # 1 mul / element

    # Numerically-stable cross entropy; the target logit is gathered on the
    # shifted values so the row max cancels out of (lse - picked).
    m = jnp.max(logits, axis=-1, keepdims=True)
    shifted = logits - m
    sumexp = jnp.sum(jnp.exp(shifted), axis=-1, keepdims=True)
    col = jax.lax.broadcasted_iota(jnp.int32, shifted.shape, 1)
    picked = jnp.sum(jnp.where(col == tgt, shifted, 0.0),
                     axis=-1, keepdims=True)                   # (tile_n, 1)
    per_example = jnp.log(sumexp) - picked                     # (tile_n, 1)

    # Mask ragged-edge garbage rows and clamped duplicate tiles. A select (not
    # a multiply) so Inf/NaN from garbage rows cannot leak into the sum.
    n_valid = n_valid_ref[0]
    tile_idx = p * tiles_per_core + i
    row = jax.lax.broadcasted_iota(jnp.int32, (tile_n, 1), 0) + tile_idx * tile_n
    per_example = jnp.where(row < n_valid, per_example, 0.0)

    acc_ref[...] += jnp.sum(per_example, keepdims=True)        # (1, 1)

    @pl.when(i == pl.num_programs(1) - 1)
    def _():
        # Lane/sublane-aligned (8,128) partial-sum block, one per core.
        out_ref[...] = jnp.broadcast_to(acc_ref[...], out_ref.shape)


def logitnorm_loss(x: jax.Array, target: jax.Array, *,
                   t: float = T, eps: float = EPS,
                   tile_n: int | None = None) -> jax.Array:
    """x: (N, C) logits (any float dtype), target: (N,) int class ids -> f32 scalar."""
    n, c = x.shape
    itemsize = jnp.dtype(x.dtype).itemsize

    if tile_n is None:
        # Size the tile by VMEM bytes per grid step, not rows. The class axis
        # is lane-padded to 128 in VMEM; besides the double-buffered native-
        # dtype pipeline buffers budget ~ten f32-wide live rows for the cast
        # copy / logits / exp / iota / target buffers / column reductions.
        lanes = -(-c // 128) * 128
        per_row_bytes = 2 * lanes * itemsize + 10 * lanes * 4
        budget = 28 * 1024 * 1024
        tile_n = min(max(budget // per_row_bytes, 8), 8192)
    n_ceil8 = -(-n // 8) * 8
    tile_n = int(max(8, min(tile_n, n_ceil8) // 8 * 8))

    n_tiles = pl.cdiv(n, tile_n)
    tiles_per_core = pl.cdiv(n_tiles, NUM_CORES)

    tgt2d = target.astype(jnp.int32).reshape(n, 1)
    n_valid = jnp.array([n], dtype=jnp.int32)   # runtime scalar via SMEM prefetch

    def tile_map(p, i, n_valid_ref):
        # Clamp so the (at most one) overflow tile of the uneven core split
        # never issues an out-of-range block; it is masked to zero in-kernel.
        return (jnp.minimum(p * tiles_per_core + i, n_tiles - 1), 0)

    kernel = functools.partial(_logitnorm_loss_kernel, tile_n=tile_n,
                               tiles_per_core=tiles_per_core, t=t, eps=eps)

    out = pl.pallas_call(
        kernel,
        out_shape=jax.ShapeDtypeStruct((NUM_CORES * 8, 128), jnp.float32),
        grid_spec=pltpu.PrefetchScalarGridSpec(
            num_scalar_prefetch=1,
            grid=(NUM_CORES, tiles_per_core),
            in_specs=[
                pl.BlockSpec((tile_n, c), tile_map),   # x streamed in native dtype
                pl.BlockSpec((tile_n, 1), tile_map),   # targets
            ],
            out_specs=pl.BlockSpec((8, 128), lambda p, i, n_valid_ref: (p, 0)),
            scratch_shapes=[pltpu.VMEM((1, 1), jnp.float32)],
        ),
        compiler_params=pltpu.CompilerParams(
            dimension_semantics=("parallel", "arbitrary"),
            vmem_limit_bytes=48 * 1024 * 1024,
        ),
    )(n_valid, x, tgt2d)

    partials = out[::8, 0]                      # one partial sum per core
    return jnp.sum(partials) / jnp.float32(n)


def _reference(x, target, t=T, eps=EPS):
    norms = jnp.linalg.norm(x, axis=-1, keepdims=True) + eps
    ln = (x / norms) / t
    n = x.shape[0]
    return jnp.mean(jax.nn.logsumexp(ln, axis=-1) - ln[jnp.arange(n), target])


if __name__ == "__main__":
    key = jax.random.PRNGKey(0)
    k1, k2, k3, k4 = jax.random.split(key, 4)

    # Case 1: N=50, C=32 — multi-tile, ragged last tile, even core split.
    x1 = jax.random.normal(k1, (50, 32), dtype=jnp.float32)
    t1 = jax.random.randint(k2, (50,), 0, 32, dtype=jnp.int32)
    # Case 2: N=35, C=32 with tile 8 -> 5 tiles (odd): exercises the clamped
    # duplicate tile on the second core.
    x2 = jax.random.normal(k3, (35, 32), dtype=jnp.float32)
    t2 = jax.random.randint(k4, (35,), 0, 32, dtype=jnp.int32)

    loss1 = logitnorm_loss(x1, t1, tile_n=16)    # grid (2, 2)
    loss1_auto = logitnorm_loss(x1, t1)          # auto tile -> single ragged tile
    loss2 = logitnorm_loss(x2, t2, tile_n=8)     # grid (2, 3), one clamped tile
    jax.block_until_ready((loss1, loss1_auto, loss2))

    ref1 = _reference(x1, t1)
    ref2 = _reference(x2, t2)

    # Tolerance accounts for the rsqrt fusion + tiled accumulation order.
    assert jnp.allclose(loss1, ref1, rtol=1e-4, atol=1e-5), (loss1, ref1)
    assert jnp.allclose(loss1_auto, ref1, rtol=1e-4, atol=1e-5), (loss1_auto, ref1)
    assert jnp.allclose(loss2, ref2, rtol=1e-4, atol=1e-5), (loss2, ref2)

    print("KERNEL_OK")
</pallas_src>

<mosaic_0001>
module attributes {stable_mosaic.version = 11 : i64} {
  func.func @_logitnorm_loss_kernel(%arg0: i32, %arg1: i32, %arg2: memref<1xi32, #tpu.memory_space<smem>>, %arg3: memref<16x32xf32, #tpu.memory_space<vmem>>, %arg4: memref<16x1xi32, #tpu.memory_space<vmem>>, %arg5: memref<8x128xf32, #tpu.memory_space<vmem>>, %arg6: memref<1x1xf32, #tpu.memory_space<vmem>>) attributes {dimension_semantics = [#tpu.dimension_semantics<parallel>, #tpu.dimension_semantics<arbitrary>], iteration_bounds = array<i64: 2, 2>, scalar_prefetch = 1 : i64, scratch_operands = 1 : i64, tpu.core_type = #tpu.core_type<tc>, window_params = [{transform_indices = @transform_0, window_bounds = array<i64: 16, 32>}, {transform_indices = @transform_1, window_bounds = array<i64: 16, 1>}, {transform_indices = @transform_2, window_bounds = array<i64: 8, 128>}]} {
    %c0_i32 = arith.constant 0 : i32
    %0 = arith.cmpi eq, %arg1, %c0_i32 : i32
    %1 = arith.extui %0 : i1 to i32
    %c0_i32_0 = arith.constant 0 : i32
    %2 = arith.cmpi ne, %1, %c0_i32_0 : i32
    scf.if %2 {
      %cst_18 = arith.constant 0.000000e+00 : f32
      %53 = vector.broadcast %cst_18 : f32 to vector<1x1xf32>
      %c0_19 = arith.constant 0 : index
      %c0_20 = arith.constant 0 : index
      %54 = vector.load %arg6[%c0_19, %c0_20] : memref<1x1xf32, #tpu.memory_space<vmem>>, vector<1x1xf32>
      tpu.vector_store %arg6[%c0_19, %c0_20], %53 {strides = array<i32>} : memref<1x1xf32, #tpu.memory_space<vmem>>, vector<1x1xf32>,
    } else {
    }
    %c0 = arith.constant 0 : index
    %c0_1 = arith.constant 0 : index
    %3 = vector.load %arg3[%c0, %c0_1] : memref<16x32xf32, #tpu.memory_space<vmem>>, vector<16x32xf32>
    %c0_2 = arith.constant 0 : index
    %c0_3 = arith.constant 0 : index
    %4 = vector.load %arg4[%c0_2, %c0_3] : memref<16x1xi32, #tpu.memory_space<vmem>>, vector<16x1xi32>
    %5 = arith.mulf %3, %3 : vector<16x32xf32>
    %cst = arith.constant dense<0.000000e+00> : vector<16xf32>
    %6 = vector.multi_reduction <add>, %5, %cst [1] : vector<16x32xf32> to vector<16xf32>
    %7 = vector.shape_cast %6 : vector<16xf32> to vector<16x1xf32>
    %cst_4 = arith.constant 9.99999982E-15 : f32
    %8 = vector.broadcast %cst_4 : f32 to vector<16x1xf32>
    %9 = arith.addf %7, %8 : vector<16x1xf32>
    %10 = math.rsqrt %9 : vector<16x1xf32>
    %cst_5 = arith.constant 1.000000e+02 : f32
    %11 = vector.broadcast %cst_5 : f32 to vector<16x1xf32>
    %12 = arith.mulf %10, %11 : vector<16x1xf32>
    %13 = vector.broadcast %12 : vector<16x1xf32> to vector<16x32xf32>
    %14 = arith.mulf %3, %13 : vector<16x32xf32>
    %cst_6 = arith.constant dense<0xFF800000> : vector<16xf32>
    %15 = vector.multi_reduction <maximumf>, %14, %cst_6 [1] : vector<16x32xf32> to vector<16xf32>
    %16 = vector.shape_cast %15 : vector<16xf32> to vector<16x1xf32>
    %17 = vector.broadcast %16 : vector<16x1xf32> to vector<16x32xf32>
    %18 = arith.subf %14, %17 : vector<16x32xf32>
    %19 = math.exp %18 : vector<16x32xf32>
    %cst_7 = arith.constant dense<0.000000e+00> : vector<16xf32>
    %20 = vector.multi_reduction <add>, %19, %cst_7 [1] : vector<16x32xf32> to vector<16xf32>
    %21 = vector.shape_cast %20 : vector<16xf32> to vector<16x1xf32>
    %22 = tpu.iota {dimensions = array<i32: 1>} : vector<16x32xi32>
    %23 = vector.broadcast %4 : vector<16x1xi32> to vector<16x32xi32>
    %24 = arith.cmpi eq, %22, %23 : vector<16x32xi32>
    %cst_8 = arith.constant 0.000000e+00 : f32
    %25 = vector.broadcast %cst_8 : f32 to vector<16x32xf32>
    %26 = arith.select %24, %18, %25 : vector<16x32xi1>, vector<16x32xf32>
    %cst_9 = arith.constant dense<0.000000e+00> : vector<16xf32>
    %27 = vector.multi_reduction <add>, %26, %cst_9 [1] : vector<16x32xf32> to vector<16xf32>
    %28 = vector.shape_cast %27 : vector<16xf32> to vector<16x1xf32>
    %29 = math.log %21 : vector<16x1xf32>
    %30 = arith.subf %29, %28 : vector<16x1xf32>
    %c0_10 = arith.constant 0 : index
    %31 = memref.load %arg2[%c0_10] : memref<1xi32, #tpu.memory_space<smem>>
    %c2_i32 = arith.constant 2 : i32
    %32 = arith.muli %arg0, %c2_i32 : i32
    %33 = arith.addi %32, %arg1 : i32
    %34 = tpu.iota {dimensions = array<i32: 0>} : vector<16x1xi32>
    %c16_i32 = arith.constant 16 : i32
    %35 = arith.muli %33, %c16_i32 : i32
    %36 = vector.broadcast %35 : i32 to vector<16x1xi32>
    %37 = arith.addi %34, %36 : vector<16x1xi32>
    %38 = vector.broadcast %31 : i32 to vector<16x1xi32>
    %39 = arith.cmpi slt, %37, %38 : vector<16x1xi32>
    %cst_11 = arith.constant 0.000000e+00 : f32
    %40 = vector.broadcast %cst_11 : f32 to vector<16x1xf32>
    %41 = arith.select %39, %30, %40 : vector<16x1xi1>, vector<16x1xf32>
    %c0_12 = arith.constant 0 : index
    %c0_13 = arith.constant 0 : index
    %42 = vector.load %arg6[%c0_12, %c0_13] : memref<1x1xf32, #tpu.memory_space<vmem>>, vector<1x1xf32>
    %43 = vector.shape_cast %41 : vector<16x1xf32> to vector<1x16x1xf32>
    %cst_14 = arith.constant dense<0.000000e+00> : vector<1xf32>
    %44 = vector.multi_reduction <add>, %43, %cst_14 [1, 2] : vector<1x16x1xf32> to vector<1xf32>
    %45 = vector.shape_cast %44 : vector<1xf32> to vector<1x1x1xf32>
    %46 = vector.extract %45[0, 0, 0] : f32 from vector<1x1x1xf32>
    %47 = vector.broadcast %46 : f32 to vector<1x1xf32>
    %48 = arith.addf %42, %47 : vector<1x1xf32>
    %c0_15 = arith.constant 0 : index
    %c0_16 = arith.constant 0 : index
    %49 = vector.load %arg6[%c0_15, %c0_16] : memref<1x1xf32, #tpu.memory_space<vmem>>, vector<1x1xf32>
    tpu.vector_store %arg6[%c0_15, %c0_16], %48 {strides = array<i32>} : memref<1x1xf32, #tpu.memory_space<vmem>>, vector<1x1xf32>,
    %c1_i32 = arith.constant 1 : i32
    %50 = arith.cmpi eq, %arg1, %c1_i32 : i32
    %51 = arith.extui %50 : i1 to i32
    %c0_i32_17 = arith.constant 0 : i32
    %52 = arith.cmpi ne, %51, %c0_i32_17 : i32
    scf.if %52 {
      %c0_18 = arith.constant 0 : index
      %c0_19 = arith.constant 0 : index
      %53 = vector.load %arg6[%c0_18, %c0_19] : memref<1x1xf32, #tpu.memory_space<vmem>>, vector<1x1xf32>
      %54 = vector.shape_cast %53 : vector<1x1xf32> to vector<1x1xf32>
      %55 = vector.broadcast %54 : vector<1x1xf32> to vector<8x128xf32>
      %c0_20 = arith.constant 0 : index
      %c0_21 = arith.constant 0 : index
      %56 = vector.load %arg5[%c0_20, %c0_21] : memref<8x128xf32, #tpu.memory_space<vmem>>, vector<8x128xf32>
      tpu.vector_store %arg5[%c0_20, %c0_21], %55 {strides = array<i32>} : memref<8x128xf32, #tpu.memory_space<vmem>>, vector<8x128xf32>,
    } else {
    }
    return
  }
  func.func @transform_0(%arg0: i32, %arg1: i32, %arg2: memref<1xi32, #tpu.memory_space<smem>>) -> (i32, i32) {
    %c2_i32 = arith.constant 2 : i32
    %0 = arith.muli %arg0, %c2_i32 : i32
    %1 = arith.addi %0, %arg1 : i32
    %c3_i32 = arith.constant 3 : i32
    %2 = arith.minsi %1, %c3_i32 : i32
    %c0_i32 = arith.constant 0 : i32
    %c0_i32_0 = arith.constant 0 : i32
    return %2, %c0_i32 : i32, i32
  }
  func.func @transform_1(%arg0: i32, %arg1: i32, %arg2: memref<1xi32, #tpu.memory_space<smem>>) -> (i32, i32) {
    %c2_i32 = arith.constant 2 : i32
    %0 = arith.muli %arg0, %c2_i32 : i32
    %1 = arith.addi %0, %arg1 : i32
    %c3_i32 = arith.constant 3 : i32
    %2 = arith.minsi %1, %c3_i32 : i32
    %c0_i32 = arith.constant 0 : i32
    %c0_i32_0 = arith.constant 0 : i32
    return %2, %c0_i32 : i32, i32
  }
  func.func @transform_2(%arg0: i32, %arg1: i32, %arg2: memref<1xi32, #tpu.memory_space<smem>>) -> (i32, i32) {
    %c0_i32 = arith.constant 0 : i32
    %c0_i32_0 = arith.constant 0 : i32
    return %arg0, %c0_i32 : i32, i32
  }
}

</mosaic_0001>

<llo_original>
// kernel: tpu_custom_call.1
$region0: #{tpu_custom_call.1}
  #allocation0 [shape = 'u32[]', space=smem, size = 0x4, offset = 0x4, fixed_abs, tag = 'smem constant byte address 0x4 - core index']
  #allocation1 [shape = 'u32[144,128]{1,0:T(1,128)}', space=vmem, size = 0x12000, scoped, tag = 'internal scratch']
  #allocation2 [shape = 'f32[1,1]{1,0:T(1,128)}', space=vmem, size = 0x200, scoped, tag = 'scratch operand']
  #allocation3 [shape = 's32[1]{0}', space=sflag, size = 0x4, scoped, tag = 'scoped memory for tpu_custom_call.1']
  #allocation4 [shape = 's32[1]{0:T(128)S(6)}', space=smem, size = 0x200, scoped, tag = 'prefetched SMEM operand 0']
  %s0 = inlined_call_operand.<no memory space> [shape: s32[1], index: 0, kind: input, shape index: {}]
  %s1 = inlined_call_operand.vmem [shape: f32[50,32], index: 1, kind: input, shape index: {}]
  %s2 = inlined_call_operand.vmem [shape: s32[50,1], index: 2, kind: input, shape index: {}]
  %s3 = inlined_call_operand.hbm [shape: f32[16,128], index: 3, kind: output, shape index: {}]
  %s4 = sld [smem:[#allocation0]]
  $region49: #{tpu_custom_call.1} parent=0
    _
  %s6 = ssub.s32 1, %s4
  %s7 = scalar_select 0, %s6, %s4
  %8 = sst [smem:[#allocation4]] %s0
  $region1: #{tpu_custom_call.1} parent=0
    #allocation5 [shape = 'u8[8192]{0}', space=vmem, size = 0x2000, scoped, tag = 'output window, operand 0']
    #allocation6 [shape = 's32[2]{0}', space=sflag, size = 0x8, scoped, tag = 'scoped memory for tpu_custom_call.1']
    %9 = vsyncpa [#allocation6], 0
    %s10 = scalar_lea.sflag [#allocation6], 1
    %11 = vsyncpa %s10, 0
    loop: start=0, step=1, limit=6
    $region2: #{tpu_custom_call.1} parent=1 // loop_pre_header
      _
    $region3: #{tpu_custom_call.1} parent=1 // loop_header
      %s13 = sphi 0, %s17
      %p14 = scmp.ge.s32.totalorder %s13, 6
      %s20 = sphi 0, %s32
      %s21 = sphi 0, %s28
      %s22 = sphi 0, %s20
      %s23 = sphi 0, %s21
      %s24 = sphi 0, %s22
      %s25 = sphi 0, %s23
      %s43 = sphi 0, %s45
      %s46 = sphi 0, %s43
      %s47 = sphi 0, %s46
      %s63 = sphi 0, %s47
      %s77 = sphi 0, %s79
      %s80 = sphi 0, %s77
      %s81 = sphi 0, %s80
      %s97 = sphi 0, %s81
      %s103 = sphi 0, %s105
      %s106 = sphi 0, %s103
      %s107 = sphi 0, %s106
      %s123 = sphi 0, %s107
    $region4: #{tpu_custom_call.1} parent=1 // loop_header_branch
      %16 = sbr.rel (%p14) target = $region8
    $region5: #{tpu_custom_call.1} parent=1 // loop_body
      %s18 = ssub.s32 %s13, 1
      %s19 = ssub.s32 %s13, 2
      %s26 = sadd.s32 1, %s21
      %p27 = scmp.ge.s32.totalorder %s26, 2
      %s28 = scalar_select %p27, 0, %s26
      %s29 = sadd.s32 1, %s20
      %s30 = scalar_select %p27, %s29, %s20
      %p31 = scmp.ge.s32.totalorder %s30, 2
      %s32 = scalar_select %p31, 0, %s30
      %s33 = smul.u32 %s20, 2
      %s34 = sadd.s32 %s33, %s21
      %p35 = scmp.lt.s32.totalorder %s34, 3
      %s36 = scalar_select %p35, %s34, 3
      %s37 = smul.u32 %s32, 2
      %s38 = sadd.s32 %s37, %s28
      %p39 = scmp.lt.s32.totalorder %s38, 3
      %s40 = scalar_select %p39, %s38, 3
      %s41 = ssub.s32 %s36, %s40
      %p42 = scmp.eq.s32.totalorder %s41, 0
      %s44 = sadd.s32 %s43, 1
      %s45 = scalar_select %p42, %s43, %s44
      %p48 = pneg %p42
      %p49 = scmp.eq.s32.totalorder %s13, 3
      %p50 = por %p48, %p49
      %p51 = scmp.ne.s32.totalorder %s43, %s46
      %p52 = scmp.eq.s32.totalorder %s13, 0
      %p53 = por %p51, %p52
      %p54 = scmp.ne.s32.totalorder %s43, %s46
      %p55 = scmp.eq.s32.totalorder %s18, 3
      %p56 = por %p54, %p55
      %p57 = scmp.ne.s32.totalorder %s46, %s47
      %p58 = scmp.eq.s32.totalorder %s18, 0
      %p59 = por %p57, %p58
      %p60 = scmp.ne.s32.totalorder %s46, %s47
      %p61 = scmp.eq.s32.totalorder %s19, 3
      %p62 = por %p60, %p61
      %p64 = scmp.ne.s32.totalorder %s47, %s63
      %p65 = scmp.eq.s32.totalorder %s19, 0
      %p66 = por %p64, %p65
      %s67 = smul.u32 %s20, 2
      %s68 = sadd.s32 %s67, %s21
      %p69 = scmp.lt.s32.totalorder %s68, 3
      %s70 = scalar_select %p69, %s68, 3
      %s71 = smul.u32 %s32, 2
      %s72 = sadd.s32 %s71, %s28
      %p73 = scmp.lt.s32.totalorder %s72, 3
      %s74 = scalar_select %p73, %s72, 3
      %s75 = ssub.s32 %s70, %s74
      %p76 = scmp.eq.s32.totalorder %s75, 0
      %s78 = sadd.s32 %s77, 1
      %s79 = scalar_select %p76, %s77, %s78
      %p82 = pneg %p76
      %p83 = scmp.eq.s32.totalorder %s13, 3
      %p84 = por %p82, %p83
      %p85 = scmp.ne.s32.totalorder %s77, %s80
      %p86 = scmp.eq.s32.totalorder %s13, 0
      %p87 = por %p85, %p86
      %p88 = scmp.ne.s32.totalorder %s77, %s80
      %p89 = scmp.eq.s32.totalorder %s18, 3
      %p90 = por %p88, %p89
      %p91 = scmp.ne.s32.totalorder %s80, %s81
      %p92 = scmp.eq.s32.totalorder %s18, 0
      %p93 = por %p91, %p92
      %p94 = scmp.ne.s32.totalorder %s80, %s81
      %p95 = scmp.eq.s32.totalorder %s19, 3
      %p96 = por %p94, %p95
      %p98 = scmp.ne.s32.totalorder %s81, %s97
      %p99 = scmp.eq.s32.totalorder %s19, 0
      %p100 = por %p98, %p99
      %s101 = ssub.s32 %s20, %s32
      %p102 = scmp.eq.s32.totalorder %s101, 0
      %s104 = sadd.s32 %s103, 1
      %s105 = scalar_select %p102, %s103, %s104
      %p108 = pneg %p102
      %p109 = scmp.eq.s32.totalorder %s13, 3
      %p110 = por %p108, %p109
      %p111 = scmp.ne.s32.totalorder %s103, %s106
      %p112 = scmp.eq.s32.totalorder %s13, 0
      %p113 = por %p111, %p112
      %p114 = scmp.ne.s32.totalorder %s103, %s106
      %p115 = scmp.eq.s32.totalorder %s18, 3
      %p116 = por %p114, %p115
      %p117 = scmp.ne.s32.totalorder %s106, %s107
      %p118 = scmp.eq.s32.totalorder %s18, 0
      %p119 = por %p117, %p118
      %p120 = scmp.ne.s32.totalorder %s106, %s107
      %p121 = scmp.eq.s32.totalorder %s19, 3
      %p122 = por %p120, %p121
      %p124 = scmp.ne.s32.totalorder %s107, %s123
      %p125 = scmp.eq.s32.totalorder %s19, 0
      %p126 = por %p124, %p125
      %p127 = scmp.le.s32.totalorder 1, %s13
      %p128 = scmp.lt.s32.totalorder %s13, 5
      %p129 = pnand %p127, %p128
      %p130 = pneg %p129
      // Predicated region
      $region9: #{tpu_custom_call.1} parent=5 // pred_check
        _
      $region10: #{tpu_custom_call.1} parent=5 // pred_check_branch
        %132 = sbr.rel (%p129) target = $region12
      $region11: #{tpu_custom_call.1} parent=5 // pred_region
        %s133 = ssub.s32 %s13, 1
      $region12: #{tpu_custom_call.1} parent=5 // pred_fallthru
        _
      %p134 = scmp.lt.s32.totalorder %s13, 4
      // Predicated region
      $region13: #{tpu_custom_call.1} parent=5 // pred_check
        %p135 = pneg %p134
      $region14: #{tpu_custom_call.1} parent=5 // pred_check_branch
        %137 = sbr.rel (%p135) target = $region16
      $region15: #{tpu_custom_call.1} parent=5 // pred_region
        // Predicated region
        $region17: #{tpu_custom_call.1} parent=15 // pred_check
          %p138 = pneg %p53
        $region18: #{tpu_custom_call.1} parent=15 // pred_check_branch
          %140 = sbr.rel (%p138) target = $region20
        $region19: #{tpu_custom_call.1} parent=15 // pred_region
          %s141 = smul.u32 %s20, 2
          %s142 = sadd.s32 %s141, %s21
          %p143 = scmp.lt.s32.totalorder %s142, 3
          %s144 = scalar_select %p143, %s142, 3
          %s145 = smul.u32 2, %s144
          %s146 = ssub.s32 7, %s145
          %p147 = scmp.lt.s32.totalorder %s146, 2
          %s148 = scalar_select %p147, %s146, 2
          %s149 = smul.u32 128, %s148
          %p150 = scmp.lt.s32.totalorder %s145, 6
          %s151 = scalar_select %p150, %s145, 6
          %s152 = smul.addr %s151, 8
          %s153 = scalar_lea.vmem %s1, %s152
          %s154 = smul.u32 %s20, 2
          %s155 = sadd.s32 %s154, %s21
          %p156 = scmp.lt.s32.totalorder %s155, 3
          %s157 = scalar_select %p156, %s155, 3
          %s158 = smul.u32 2, %s157
          %s159 = ssub.s32 7, %s158
          %p160 = scmp.lt.s32.totalorder %s159, 2
          %s161 = scalar_select %p160, %s159, 2
          %s162 = smul.u32 128, %s161
        $region20: #{tpu_custom_call.1} parent=15 // pred_fallthru
          _
        // Predicated region
        $region21: #{tpu_custom_call.1} parent=15 // pred_check
          %p163 = pneg %p87
        $region22: #{tpu_custom_call.1} parent=15 // pred_check_branch
          %165 = sbr.rel (%p163) target = $region24
        $region23: #{tpu_custom_call.1} parent=15 // pred_region
          %s166 = smul.u32 %s20, 2
          %s167 = sadd.s32 %s166, %s21
          %p168 = scmp.lt.s32.totalorder %s167, 3
          %s169 = scalar_select %p168, %s167, 3
          %s170 = smul.u32 2, %s169
          %s171 = ssub.s32 7, %s170
          %p172 = scmp.lt.s32.totalorder %s171, 2
          %s173 = scalar_select %p172, %s171, 2
          %s174 = smul.u32 128, %s173
          %p175 = scmp.lt.s32.totalorder %s170, 6
          %s176 = scalar_select %p175, %s170, 6
          %s177 = smul.addr %s176, 8
          %s178 = scalar_lea.vmem %s2, %s177
          %s179 = smul.u32 %s20, 2
          %s180 = sadd.s32 %s179, %s21
          %p181 = scmp.lt.s32.totalorder %s180, 3
          %s182 = scalar_select %p181, %s180, 3
          %s183 = smul.u32 2, %s182
          %s184 = ssub.s32 7, %s183
          %p185 = scmp.lt.s32.totalorder %s184, 2
          %s186 = scalar_select %p185, %s184, 2
          %s187 = smul.u32 128, %s186
        $region24: #{tpu_custom_call.1} parent=15 // pred_fallthru
          _
      $region16: #{tpu_custom_call.1} parent=5 // pred_fallthru
        _
      %p188 = scmp.le.s32.totalorder 1, %s13
      %p189 = scmp.lt.s32.totalorder %s13, 5
      %p190 = pnand %p188, %p189
      %p191 = pneg %p190
      // Predicated region
      $region25: #{tpu_custom_call.1} parent=5 // pred_check
        _
      $region26: #{tpu_custom_call.1} parent=5 // pred_check_branch
        %193 = sbr.rel (%p190) target = $region28
      $region27: #{tpu_custom_call.1} parent=5 // pred_region
        %s194 = ssub.s32 %s13, 1
        %s195 = smul.u32 %s22, 2
        %s196 = sadd.s32 %s195, %s23
        %p197 = scmp.lt.s32.totalorder %s196, 3
        %s198 = scalar_select %p197, %s196, 3
        %s199 = smul.u32 2, %s198
        %s200 = ssub.s32 7, %s199
        %p201 = scmp.lt.s32.totalorder %s200, 2
        %s202 = scalar_select %p201, %s200, 2
        %s203 = smul.u32 128, %s202
        %p204 = scmp.lt.s32.totalorder %s199, 6
        %s205 = scalar_select %p204, %s199, 6
        %s206 = smul.addr %s205, 8
        %s207 = scalar_lea.vmem %s1, %s206
        %p208 = pneg %p59
        %p209 = pneg %p56
        %s210 = smul.u32 %s22, 2
        %s211 = sadd.s32 %s210, %s23
        %p212 = scmp.lt.s32.totalorder %s211, 3
        %s213 = scalar_select %p212, %s211, 3
        %s214 = smul.u32 2, %s213
        %s215 = ssub.s32 7, %s214
        %p216 = scmp.lt.s32.totalorder %s215, 2
        %s217 = scalar_select %p216, %s215, 2
        %s218 = smul.u32 128, %s217
        %p219 = scmp.lt.s32.totalorder %s214, 6
        %s220 = scalar_select %p219, %s214, 6
        %s221 = smul.addr %s220, 8
        %s222 = scalar_lea.vmem %s2, %s221
        %p223 = pneg %p93
        %p224 = pneg %p90
        %p225 = pneg %p119
        %p226 = pneg %p116
        %s227 = sand.u32 %s106, 1
        %s228 = scalar_lea.sflag [#allocation6], %s227
        %s229 = sand.u32 %s106, 1
        %s230 = smul.addr %s229, 8
        %s231 = scalar_lea.vmem [#allocation5], %s230
        %s232 = smul.u32 %s22, 2
        %s233 = sadd.s32 %s232, %s23
        %p234 = scmp.lt.s32.totalorder %s233, 3
        %s235 = scalar_select %p234, %s233, 3
        %s236 = smul.u32 2, %s235
        %s237 = ssub.s32 7, %s236
        %p238 = scmp.lt.s32.totalorder %s237, 2
        %s239 = scalar_select %p238, %s237, 2
        %s240 = smul.u32 128, %s239
        %p241 = scmp.lt.s32.totalorder %s236, 6
        %s242 = scalar_select %p241, %s236, 6
        %s243 = smul.addr %s242, 8
        %s244 = scalar_lea.vmem %s1, %s243
        %s245 = smul.u32 %s22, 2
        %s246 = sadd.s32 %s245, %s23
        %p247 = scmp.lt.s32.totalorder %s246, 3
        %s248 = scalar_select %p247, %s246, 3
        %s249 = smul.u32 2, %s248
        %s250 = ssub.s32 7, %s249
        %p251 = scmp.lt.s32.totalorder %s250, 2
        %s252 = scalar_select %p251, %s250, 2
        %s253 = smul.u32 128, %s252
        %s254 = smul.u32 %s22, 2
        %s255 = sadd.s32 %s254, %s23
        %p256 = scmp.lt.s32.totalorder %s255, 3
        %s257 = scalar_select %p256, %s255, 3
        %s258 = smul.u32 2, %s257
        %s259 = ssub.s32 7, %s258
        %p260 = scmp.lt.s32.totalorder %s259, 2
        %s261 = scalar_select %p260, %s259, 2
        %s262 = smul.u32 128, %s261
        %p263 = scmp.lt.s32.totalorder %s258, 6
        %s264 = scalar_select %p263, %s258, 6
        %s265 = smul.addr %s264, 8
        %s266 = scalar_lea.vmem %s2, %s265
        %s267 = smul.u32 %s22, 2
        %s268 = sadd.s32 %s267, %s23
        %p269 = scmp.lt.s32.totalorder %s268, 3
        %s270 = scalar_select %p269, %s268, 3
        %s271 = smul.u32 2, %s270
        %s272 = ssub.s32 7, %s271
        %p273 = scmp.lt.s32.totalorder %s272, 2
        %s274 = scalar_select %p273, %s272, 2
        %s275 = smul.u32 128, %s274
        %p276 = scmp.eq.s32.totalorder %s23, 0
        // Predicated region
        $region29: #{tpu_custom_call.1} parent=27 // pred_check
          %p277 = pneg %p276
        $region30: #{tpu_custom_call.1} parent=27 // pred_check_branch
          %279 = sbr.rel (%p277) target = $region32
        $region31: #{tpu_custom_call.1} parent=27 // pred_region
          %vm280 = vcmask 0
          %281 = vst.msk [vmem:[#allocation2] sm:$0x1] %vm280, 0.0
        $region32: #{tpu_custom_call.1} parent=27 // pred_fallthru
          _
        %v282 = vld [vmem:[%s244] sm:$0xff]
        %v283 = vld [vmem:[%s244 + $0x8] sm:$0xff]
        %v284 = vld [vmem:[%s266] sm:$0xff]
        %v285 = vld [vmem:[%s266 + $0x8] sm:$0xff]
        %v286 = vmul.f32 %v282, %v282
        %v287 = vmul.f32 %v283, %v283
        %vm288 = vcmask 261120
        %v289 = vsel %vm288, %v286, 0.0
        %290 = vadd.xlane.f32.xlu0 %v289
        %v291 = vpop.xlane.xlu0 %290
        %v292 = vsel %vm288, %v287, 0.0
        %293 = vadd.xlane.f32.xlu0 %v292
        %v294 = vpop.xlane.xlu0 %293
        %v295 = vadd.f32 %v291, 1e-14
        %v296 = vadd.f32 %v294, 1e-14
        %v297 = vrsqrt.pop %v295
        %v298 = vrsqrt.pop %v296
        %v299 = vmul.f32 %v297, 100.0
        %v300 = vmul.f32 %v298, 100.0
        %v301 = vmul.f32 %v282, %v299
        %v302 = vmul.f32 %v283, %v300
        %v303 = vsel %vm288, %v301, -inf
        %304 = vmax.xlane.f32.xlu0 %v303
        %v305 = vpop.xlane.xlu0 %304
        %v306 = vsel %vm288, %v302, -inf
        %307 = vmax.xlane.f32.xlu0 %v306
        %v308 = vpop.xlane.xlu0 %307
        %v309 = vsub.f32 %v301, %v305
        %v310 = vsub.f32 %v302, %v308
        %v311 = vmul.f32 %v309, 1.442695
        %v312 = vpow.pop %v311
        %v313 = vmul.f32 %v310, 1.442695
        %v314 = vpow.pop %v313
        %v315 = vsel %vm288, %v312, 0.0
        %316 = vadd.xlane.f32.xlu0 %v315
        %v317 = vpop.xlane.xlu0 %316
        %v318 = vsel %vm288, %v314, 0.0
        %319 = vadd.xlane.f32.xlu0 %v318
        %v320 = vpop.xlane.xlu0 %319
        %v321 = vlaneseq
        %v322 = vand.u32 %v321, 127
        %323 = vset.pattern.permute.xlu0 0
        %324 = vperm.xlu0 %323, %v284
        %v325 = vpop.permute.xlu0 %324
        %326 = vset.pattern.permute.xlu0 0
        %327 = vperm.xlu0 %326, %v285
        %v328 = vpop.permute.xlu0 %327
        %vm329 = vcmp.eq.s32.totalorder %v322, %v325
        %vm330 = vcmp.eq.s32.totalorder %v322, %v328
        %v331 = vsel %vm329, %v309, 0.0
        %v332 = vsel %vm330, %v310, 0.0
        %v333 = vsel %vm288, %v331, 0.0
        %334 = vadd.xlane.f32.xlu0 %v333
        %v335 = vpop.xlane.xlu0 %334
        %v336 = vsel %vm288, %v332, 0.0
        %337 = vadd.xlane.f32.xlu0 %v336
        %v338 = vpop.xlane.xlu0 %337
        %v339 = vlog2.pop %v317
        %v340 = vmul.f32 %v339, 0.6931472
        %v341 = vlog2.pop %v320
        %v342 = vmul.f32 %v341, 0.6931472
        %v343 = vsub.f32 %v340, %v335
        %v344 = vsub.f32 %v342, %v338
        %s345 = sld [smem:[#allocation4]]
        %s346 = smul.u32 %s22, 2
        %s347 = sadd.s32 %s346, %s23
        %v348 = vlaneseq
        %v349 = vshrl.u32 %v348, 7
        %v350 = vadd.s32 %v349, 8
        %s351 = smul.u32 %s347, 16
        %v352 = vstv %s351
        %v353 = vadd.s32 %v349, %v352
        %v354 = vadd.s32 %v350, %v352
        %v355 = vstv %s345
        %vm356 = vcmp.lt.s32.totalorder %v353, %v355
        %vm357 = vcmp.lt.s32.totalorder %v354, %v355
        %v358 = vsel %vm356, %v343, 0.0
        %v359 = vsel %vm357, %v344, 0.0
        %v360 = vld [vmem:[#allocation2] sm:$0x1]
        %vm361 = vcmask 7168
        %v362 = vsel %vm361, %v358, 0.0
        %v363 = vsel %vm361, %v359, 0.0
        %v364 = vadd.f32 %v362, %v363
        %365 = vadd.xlane.f32.xlu0 %v364
        %v366 = vpop.xlane.xlu0 %365
        %v367 = vrot.slane %v366, 4
        %v368 = vadd.f32 %v366, %v367
        %v369 = vrot.slane %v368, 2
        %v370 = vadd.f32 %v368, %v369
        %v371 = vrot.slane %v370, 1
        %v372 = vadd.f32 %v370, %v371
        %s373 = vtos %v372
        %v374 = vstv %s373
        %v375 = vadd.f32 %v360, %v374
        %vm376 = vcmask 0
        %377 = vst.msk [vmem:[#allocation2] sm:$0x1] %vm376, %v375
        %p378 = scmp.eq.s32.totalorder %s23, 1
        // Predicated region
        $region33: #{tpu_custom_call.1} parent=27 // pred_check
          %p379 = pneg %p378
        $region34: #{tpu_custom_call.1} parent=27 // pred_check_branch
          %381 = sbr.rel (%p379) target = $region36
        $region35: #{tpu_custom_call.1} parent=27 // pred_region
          %v382 = vld [vmem:[#allocation2] sm:$0x1]
          %v384 = vlaneseq
          %v385 = vshrl.u32 %v384, 7
          %v386 = vsub.s32 0, %v385
          %v387 = vrot.slane %v382, %v386
          %388 = vset.pattern.permute.xlu0 0
          %389 = vperm.xlu0 %388, %v387
          %v390 = vpop.permute.xlu0 %389
          %392 = vst [vmem:[%s231] sm:$0xff] %v390
        $region36: #{tpu_custom_call.1} parent=27 // pred_fallthru
          _
        %s393 = sand.u32 %s106, 1
        %s394 = scalar_lea.sflag [#allocation6], %s393
        %s395 = sand.u32 %s106, 1
        %s396 = smul.addr %s395, 8
        %s397 = scalar_lea.vmem [#allocation5], %s396
        // Predicated region
        $region37: #{tpu_custom_call.1} parent=27 // pred_check
          %p398 = pneg %p116
        $region38: #{tpu_custom_call.1} parent=27 // pred_check_branch
          %400 = sbr.rel (%p398) target = $region40
        $region39: #{tpu_custom_call.1} parent=27 // pred_region
          %s402 = ssub.s32 128, 128
          %403 = vsyncadd %s394, %s402
          %s404 = smul.addr %s22, 128
          %s405 = scalar_lea.hbm %s3, %s404
          %s407 = sshll.u32 %s397, 4
          %s408 = int_to_ptr.vmem [resolvable:$true] %s407
          %410 = dma.vmem_to_hbm [thread:$0]  %s408, 128, %s405, %s394
        $region40: #{tpu_custom_call.1} parent=27 // pred_fallthru
          _
      $region28: #{tpu_custom_call.1} parent=5 // pred_fallthru
        _
      %p411 = scmp.le.s32.totalorder 2, %s13
      // Predicated region
      $region41: #{tpu_custom_call.1} parent=5 // pred_check
        %p412 = pneg %p411
      $region42: #{tpu_custom_call.1} parent=5 // pred_check_branch
        %414 = sbr.rel (%p412) target = $region44
      $region43: #{tpu_custom_call.1} parent=5 // pred_region
        %s415 = ssub.s32 %s13, 2
        // Predicated region
        $region45: #{tpu_custom_call.1} parent=43 // pred_check
          %p416 = pneg %p122
        $region46: #{tpu_custom_call.1} parent=43 // pred_check_branch
          %418 = sbr.rel (%p416) target = $region48
        $region47: #{tpu_custom_call.1} parent=43 // pred_region
          %s419 = sand.u32 %s107, 1
          %s420 = scalar_lea.sflag [#allocation6], %s419
          %s421 = sand.u32 %s107, 1
          %s422 = smul.addr %s421, 8
          %s423 = scalar_lea.vmem [#allocation5], %s422
          %424 = dma.done %s420, 128
        $region48: #{tpu_custom_call.1} parent=43 // pred_fallthru
          _
      $region44: #{tpu_custom_call.1} parent=5 // pred_fallthru
        _
    $region6: #{tpu_custom_call.1} parent=1 // loop_footer
      %s17 = sadd.s32 1, %s13
    $region7: #{tpu_custom_call.1} parent=1 // loop_footer_branch
      %12 = sbr.rel target = $region3
    $region8: #{tpu_custom_call.1} parent=1 // loop_exit
      _
    %425 = vsyncpa [#allocation6], 1
    %s426 = scalar_lea.sflag [#allocation6], 1
    %427 = vsyncpa %s426, 1

</llo_original>
